<compile_context>
chip_gen: v7x
topology: tpu7x:2x2x1
jax: 0.10.0
libtpu: 0.0.40
codegen_flags: <defaults>
</compile_context>

<pallas_src>
import math
import jax
import jax.numpy as jnp
from jax.experimental import pallas as pl
from jax.experimental.pallas import tpu as pltpu

G = 32          # batch rows packed per lane-row  (G*4 = 128 output lanes)
UNIT = 8 * G    # minimum / granularity of the batch tile: 8 packed sublanes


# --------------------------------------------------------------------------------------
# Kernel: three lane-dense matmuls, dueling combine pre-folded into w2/b2.
# --------------------------------------------------------------------------------------
def dueling_kernel(x_ref, wh_ref, bh_ref, w1_ref, b1_ref, w2_ref, b2_ref, out_ref):
    x = x_ref[...]                                                             # (TR, G*C_in)
    h = jnp.dot(x, wh_ref[...], preferred_element_type=jnp.float32) + bh_ref[...]
    h = jnp.maximum(h, 0.0)                                                    # (TR, 128)
    z = jnp.dot(h, w1_ref[...], preferred_element_type=jnp.float32) + b1_ref[...]
    z = jnp.maximum(z, 0.0)                                                    # (TR, 512)
    # dueling combine already folded into w2/b2 -> this IS the Q-value output
    out_ref[...] = jnp.dot(z, w2_ref[...],
                           preferred_element_type=jnp.float32) + b2_ref[...]   # (TR, 128)


# --------------------------------------------------------------------------------------
# Wrapper-side parameter fusion (runs once, outside the kernel).
# --------------------------------------------------------------------------------------
def _fuse_params(params, g=G):
    (wh, bh, wa1, ba1, wa2, ba2, wv1, bv1, wv2, bv2) = params

    # Fused hidden layer of both streams: [adv_hidden | value_hidden]
    w1 = jnp.concatenate([wa1, wv1], axis=1)              # (4, 16)
    b1 = jnp.concatenate([ba1, bv1], axis=1)              # (1, 16)

    # Fused output layer, block-diagonal: cols 0:4 = adv, col 4 = value
    ka, na = wa2.shape
    kv, nv = wv2.shape
    w2 = jnp.zeros((ka + kv, na + nv), jnp.float32)        # (16, 5), exact zero padding
    w2 = w2.at[:ka, :na].set(wa2)
    w2 = w2.at[ka:, na:].set(wv2)
    b2 = jnp.concatenate([ba2, bv2], axis=1)               # (1, 5)

    # Fold the dueling combine: out_j = adv_j - mean(adv) + value  ==  q @ M
    m = jnp.concatenate([jnp.eye(4, dtype=jnp.float32) - 0.25,
                         jnp.ones((1, 4), jnp.float32)], axis=0)   # (5, 4)
    w2 = w2 @ m                                            # (16, 4)
    b2 = b2 @ m                                            # (1, 4)

    # Batch-in-lanes: replicate weights block-diagonally g times, tile biases.
    eye_g = jnp.eye(g, dtype=jnp.float32)
    whp = jnp.kron(eye_g, wh)                              # (g*C_in, g*4)   = (*, 128)
    w1p = jnp.kron(eye_g, w1)                              # (g*4,   g*16)  = (128, 512)
    w2p = jnp.kron(eye_g, w2)                              # (g*16,  g*4)   = (512, 128)
    bhp = jnp.tile(bh, (1, g))                             # (1, 128)
    b1p = jnp.tile(b1, (1, g))                             # (1, 512)
    b2p = jnp.tile(b2, (1, g))                             # (1, 128)
    return whp, bhp, w1p, b1p, w2p, b2p


def _round_up(n, m):
    return ((n + m - 1) // m) * m


def _vmem_bytes(tb, c_in, weight_bytes):
    """Rough per-tile VMEM footprint (double-buffered x/out + intermediates + weights)."""
    tr = tb // G
    x_tile = 4 * tr * G * c_in
    out_tile = 4 * tr * G * 4
    interm = 4 * tr * G * (4 + 16) * 2          # h, z (+ relu copies headroom)
    return 2 * x_tile + 2 * out_tile + interm + weight_bytes


def dueling_forward(x, params, tb=16384):
    """x: (B, C_in) float32.  Returns (B, 4) float32 Q-values."""
    fused = _fuse_params(params)
    whp, bhp, w1p, b1p, w2p, b2p = fused
    B, c_in = x.shape

    # --- tile selection ---------------------------------------------------------------
    tb_req = max(UNIT, _round_up(int(tb), UNIT))            # multiple of 8*G rows
    half = max(UNIT, _round_up((B + 1) // 2, UNIT))          # keep >= 2 tiles when B allows
    tb = min(tb_req, half)

    weight_bytes = sum(int(a.size) * a.dtype.itemsize for a in fused)
    BUDGET = 40 << 20                                        # conservative across v5e/v6e/v7x
    while tb > UNIT and _vmem_bytes(tb, c_in, weight_bytes) > BUDGET:
        tb = max(UNIT, ((tb // 2) // UNIT) * UNIT)
    vmem_limit = int(min(max(2 * _vmem_bytes(tb, c_in, weight_bytes), 32 << 20), 56 << 20))

    n_tiles = pl.cdiv(B, tb)
    Bp = n_tiles * tb
    if Bp != B:
        x = jnp.pad(x, ((0, Bp - B), (0, 0)))

    # --- batch-in-lanes packing ---------------------------------------------------------
    rows = Bp // G
    tr = tb // G                                             # packed rows per tile (mult of 8)
    x_packed = x.reshape(rows, G * c_in)                     # row r = batch rows [G*r, G*r+G)

    def wspec(a):
        # weights / biases: whole-array block, VMEM-resident across all grid steps
        return pl.BlockSpec(a.shape, lambda i: (0, 0))

    out = pl.pallas_call(
        dueling_kernel,
        out_shape=jax.ShapeDtypeStruct((rows, G * 4), jnp.float32),
        grid=(n_tiles,),
        in_specs=[
            pl.BlockSpec((tr, G * c_in), lambda i: (i, 0)),  # x: batch-tiled, lane-dense
            wspec(whp), wspec(bhp),
            wspec(w1p), wspec(b1p),
            wspec(w2p), wspec(b2p),
        ],
        out_specs=pl.BlockSpec((tr, G * 4), lambda i: (i, 0)),
        compiler_params=pltpu.CompilerParams(
            dimension_semantics=("parallel",),               # megacore split on v7x
            vmem_limit_bytes=vmem_limit),
    )(x_packed, whp, bhp, w1p, b1p, w2p, b2p)

    out = out.reshape(Bp, 4)
    return out[:B] if Bp != B else out


# --------------------------------------------------------------------------------------
# Parameter init (matches the PyTorch module: xavier_uniform weights, zero biases)
# --------------------------------------------------------------------------------------
def xavier_uniform(key, fan_in, fan_out):
    bound = math.sqrt(6.0 / (fan_in + fan_out))
    return jax.random.uniform(key, (fan_in, fan_out), jnp.float32, -bound, bound)


def init_params(key, in_channel):
    k = jax.random.split(key, 5)
    wh = xavier_uniform(k[0], in_channel, 4)
    bh = jnp.zeros((1, 4), jnp.float32)
    wa1 = xavier_uniform(k[1], 4, 8)
    ba1 = jnp.zeros((1, 8), jnp.float32)
    wa2 = xavier_uniform(k[2], 8, 4)
    ba2 = jnp.zeros((1, 4), jnp.float32)
    wv1 = xavier_uniform(k[3], 4, 8)
    bv1 = jnp.zeros((1, 8), jnp.float32)
    wv2 = xavier_uniform(k[4], 8, 1)
    bv2 = jnp.zeros((1, 1), jnp.float32)
    return (wh, bh, wa1, ba1, wa2, ba2, wv1, bv1, wv2, bv2)


def dueling_ref(x, params):
    # pure-JAX reference (unfused) for correctness check
    (wh, bh, wa1, ba1, wa2, ba2, wv1, bv1, wv2, bv2) = params
    h = x @ wh + bh
    a = jnp.maximum(h, 0) @ wa1 + ba1
    adv = jnp.maximum(a, 0) @ wa2 + ba2
    v = jnp.maximum(h, 0) @ wv1 + bv1
    value = jnp.maximum(v, 0) @ wv2 + bv2
    adv_hat = adv.mean(axis=1, keepdims=True)
    return value + adv - adv_hat


if __name__ == "__main__":
    key = jax.random.PRNGKey(0)
    kx, kp = jax.random.split(key)

    # Small, forward-consistent shapes: x is (batch, in_channel).
    B, C_IN = 70, 32
    x = jax.random.normal(kx, (B, C_IN), jnp.float32)
    params = init_params(kp, C_IN)
    ref = dueling_ref(x, params)

    # Default path: B=70 -> padded to one 256-row tile (exercises padding + pack/unpack).
    out = jax.block_until_ready(dueling_forward(x, params))
    assert out.shape == (B, 4)
    assert jnp.allclose(out, ref, atol=1e-4, rtol=1e-4)

    # Multi-tile path: small explicit tile -> 3 grid steps + padding.
    B2 = 600
    x2 = jax.random.normal(kx, (B2, C_IN), jnp.float32)
    out2 = jax.block_until_ready(dueling_forward(x2, params, tb=256))
    assert jnp.allclose(out2, dueling_ref(x2, params), atol=1e-4, rtol=1e-4)

    print("KERNEL_OK")
</pallas_src>

<mosaic_0001>
module attributes {stable_mosaic.version = 11 : i64} {
  func.func @dueling_kernel(%arg0: i32, %arg1: memref<8x1024xf32, #tpu.memory_space<vmem>>, %arg2: memref<1024x128xf32, #tpu.memory_space<vmem>>, %arg3: memref<1x128xf32, #tpu.memory_space<vmem>>, %arg4: memref<128x512xf32, #tpu.memory_space<vmem>>, %arg5: memref<1x512xf32, #tpu.memory_space<vmem>>, %arg6: memref<512x128xf32, #tpu.memory_space<vmem>>, %arg7: memref<1x128xf32, #tpu.memory_space<vmem>>, %arg8: memref<8x128xf32, #tpu.memory_space<vmem>>) attributes {dimension_semantics = [#tpu.dimension_semantics<parallel>], iteration_bounds = array<i64: 1>, scalar_prefetch = 0 : i64, scratch_operands = 0 : i64, tpu.core_type = #tpu.core_type<tc>, window_params = [{transform_indices = @transform_0, window_bounds = array<i64: 8, 1024>}, {pipeline_mode = #tpu.pipeline_mode<synchronous>, transform_indices = @transform_1, window_bounds = array<i64: 1024, 128>}, {pipeline_mode = #tpu.pipeline_mode<synchronous>, transform_indices = @transform_2, window_bounds = array<i64: 1, 128>}, {pipeline_mode = #tpu.pipeline_mode<synchronous>, transform_indices = @transform_3, window_bounds = array<i64: 128, 512>}, {pipeline_mode = #tpu.pipeline_mode<synchronous>, transform_indices = @transform_4, window_bounds = array<i64: 1, 512>}, {pipeline_mode = #tpu.pipeline_mode<synchronous>, transform_indices = @transform_5, window_bounds = array<i64: 512, 128>}, {pipeline_mode = #tpu.pipeline_mode<synchronous>, transform_indices = @transform_6, window_bounds = array<i64: 1, 128>}, {transform_indices = @transform_7, window_bounds = array<i64: 8, 128>}]} {
    %c0 = arith.constant 0 : index
    %c0_0 = arith.constant 0 : index
    %0 = vector.load %arg1[%c0, %c0_0] : memref<8x1024xf32, #tpu.memory_space<vmem>>, vector<8x1024xf32>
    %c0_1 = arith.constant 0 : index
    %c0_2 = arith.constant 0 : index
    %1 = vector.load %arg2[%c0_1, %c0_2] : memref<1024x128xf32, #tpu.memory_space<vmem>>, vector<1024x128xf32>
    %cst = arith.constant dense<0.000000e+00> : vector<8x128xf32>
    %2 = tpu.matmul %0, %1, %cst {dimension_numbers = #tpu.dot_dimension_numbers<[1], [0], [0], [1], [0, 0, 1, 1], [], []>} : vector<8x1024xf32>, vector<1024x128xf32>, vector<8x128xf32> -> vector<8x128xf32>
    %c0_3 = arith.constant 0 : index
    %c0_4 = arith.constant 0 : index
    %3 = vector.load %arg3[%c0_3, %c0_4] : memref<1x128xf32, #tpu.memory_space<vmem>>, vector<1x128xf32>
    %4 = vector.broadcast %3 : vector<1x128xf32> to vector<8x128xf32>
    %5 = arith.addf %2, %4 : vector<8x128xf32>
    %cst_5 = arith.constant 0.000000e+00 : f32
    %6 = vector.broadcast %cst_5 : f32 to vector<8x128xf32>
    %7 = arith.maximumf %5, %6 : vector<8x128xf32>
    %c0_6 = arith.constant 0 : index
    %c0_7 = arith.constant 0 : index
    %8 = vector.load %arg4[%c0_6, %c0_7] : memref<128x512xf32, #tpu.memory_space<vmem>>, vector<128x512xf32>
    %cst_8 = arith.constant dense<0.000000e+00> : vector<8x512xf32>
    %9 = tpu.matmul %7, %8, %cst_8 {dimension_numbers = #tpu.dot_dimension_numbers<[1], [0], [0], [1], [0, 0, 1, 1], [], []>} : vector<8x128xf32>, vector<128x512xf32>, vector<8x512xf32> -> vector<8x512xf32>
    %c0_9 = arith.constant 0 : index
    %c0_10 = arith.constant 0 : index
    %10 = vector.load %arg5[%c0_9, %c0_10] : memref<1x512xf32, #tpu.memory_space<vmem>>, vector<1x512xf32>
    %11 = vector.broadcast %10 : vector<1x512xf32> to vector<8x512xf32>
    %12 = arith.addf %9, %11 : vector<8x512xf32>
    %cst_11 = arith.constant 0.000000e+00 : f32
    %13 = vector.broadcast %cst_11 : f32 to vector<8x512xf32>
    %14 = arith.maximumf %12, %13 : vector<8x512xf32>
    %c0_12 = arith.constant 0 : index
    %c0_13 = arith.constant 0 : index
    %15 = vector.load %arg6[%c0_12, %c0_13] : memref<512x128xf32, #tpu.memory_space<vmem>>, vector<512x128xf32>
    %cst_14 = arith.constant dense<0.000000e+00> : vector<8x128xf32>
    %16 = tpu.matmul %14, %15, %cst_14 {dimension_numbers = #tpu.dot_dimension_numbers<[1], [0], [0], [1], [0, 0, 1, 1], [], []>} : vector<8x512xf32>, vector<512x128xf32>, vector<8x128xf32> -> vector<8x128xf32>
    %c0_15 = arith.constant 0 : index
    %c0_16 = arith.constant 0 : index
    %17 = vector.load %arg7[%c0_15, %c0_16] : memref<1x128xf32, #tpu.memory_space<vmem>>, vector<1x128xf32>
    %18 = vector.broadcast %17 : vector<1x128xf32> to vector<8x128xf32>
    %19 = arith.addf %16, %18 : vector<8x128xf32>
    %c0_17 = arith.constant 0 : index
    %c0_18 = arith.constant 0 : index
    %20 = vector.load %arg8[%c0_17, %c0_18] : memref<8x128xf32, #tpu.memory_space<vmem>>, vector<8x128xf32>
    tpu.vector_store %arg8[%c0_17, %c0_18], %19 {strides = array<i32>} : memref<8x128xf32, #tpu.memory_space<vmem>>, vector<8x128xf32>,
    return
  }
  func.func @transform_0(%arg0: i32) -> (i32, i32) {
    %c0_i32 = arith.constant 0 : i32
    %c0_i32_0 = arith.constant 0 : i32
    return %arg0, %c0_i32 : i32, i32
  }
  func.func @transform_1(%arg0: i32) -> (i32, i32) {
    %c0_i32 = arith.constant 0 : i32
    %c0_i32_0 = arith.constant 0 : i32
    %c0_i32_1 = arith.constant 0 : i32
    return %c0_i32, %c0_i32_0 : i32, i32
  }
  func.func @transform_2(%arg0: i32) -> (i32, i32) {
    %c0_i32 = arith.constant 0 : i32
    %c0_i32_0 = arith.constant 0 : i32
    %c0_i32_1 = arith.constant 0 : i32
    return %c0_i32, %c0_i32_0 : i32, i32
  }
  func.func @transform_3(%arg0: i32) -> (i32, i32) {
    %c0_i32 = arith.constant 0 : i32
    %c0_i32_0 = arith.constant 0 : i32
    %c0_i32_1 = arith.constant 0 : i32
    return %c0_i32, %c0_i32_0 : i32, i32
  }
  func.func @transform_4(%arg0: i32) -> (i32, i32) {
    %c0_i32 = arith.constant 0 : i32
    %c0_i32_0 = arith.constant 0 : i32
    %c0_i32_1 = arith.constant 0 : i32
    return %c0_i32, %c0_i32_0 : i32, i32
  }
  func.func @transform_5(%arg0: i32) -> (i32, i32) {
    %c0_i32 = arith.constant 0 : i32
    %c0_i32_0 = arith.constant 0 : i32
    %c0_i32_1 = arith.constant 0 : i32
    return %c0_i32, %c0_i32_0 : i32, i32
  }
  func.func @transform_6(%arg0: i32) -> (i32, i32) {
    %c0_i32 = arith.constant 0 : i32
    %c0_i32_0 = arith.constant 0 : i32
    %c0_i32_1 = arith.constant 0 : i32
    return %c0_i32, %c0_i32_0 : i32, i32
  }
  func.func @transform_7(%arg0: i32) -> (i32, i32) {
    %c0_i32 = arith.constant 0 : i32
    %c0_i32_0 = arith.constant 0 : i32
    return %arg0, %c0_i32 : i32, i32
  }
}

</mosaic_0001>

<llo_original>
// kernel: tpu_custom_call.1
$region0: #{tpu_custom_call.1}
  #allocation0 [shape = 'u32[]', space=smem, size = 0x4, offset = 0x4, fixed_abs, tag = 'smem constant byte address 0x4 - core index']
  #allocation1 [shape = 'u32[144,128]{1,0:T(1,128)}', space=vmem, size = 0x12000, scoped, tag = 'internal scratch']
  %s0 = inlined_call_operand.hbm [shape: f32[8,1024], index: 0, kind: input, shape index: {}]
  %s1 = inlined_call_operand.hbm [shape: f32[1024,128], index: 1, kind: input, shape index: {}]
  %s2 = inlined_call_operand.vmem [shape: f32[1,128], index: 2, kind: input, shape index: {}]
  %s3 = inlined_call_operand.hbm [shape: f32[128,512], index: 3, kind: input, shape index: {}]
  %s4 = inlined_call_operand.vmem [shape: f32[1,512], index: 4, kind: input, shape index: {}]
  %s5 = inlined_call_operand.hbm [shape: f32[512,128], index: 5, kind: input, shape index: {}]
  %s6 = inlined_call_operand.vmem [shape: f32[1,128], index: 6, kind: input, shape index: {}]
  %s7 = inlined_call_operand.hbm [shape: f32[8,128], index: 7, kind: output, shape index: {}]
  %s8 = sld [smem:[#allocation0]]
  $region54: #{tpu_custom_call.1} parent=0
    _
  %s10 = ssub.s32 1, %s8
  %s11 = scalar_select 0, %s10, %s8
  $region1: #{tpu_custom_call.1} parent=0
    #allocation2 [shape = 'u8[32768]{0}', space=vmem, size = 0x8000, scoped, tag = 'input window, operand 0, single buffered']
    #allocation3 [shape = 's32[1]{0}', space=sflag, size = 0x4, scoped, tag = 'scoped memory for tpu_custom_call.1']
    #allocation4 [shape = 's32[1]{0}', space=sflag, size = 0x4, scoped, tag = 'scoped memory for tpu_custom_call.1']
    #allocation5 [shape = 'u8[524288]{0}', space=vmem, size = 0x80000, scoped, tag = 'input window, operand 1, single buffered']
    #allocation6 [shape = 's32[1]{0}', space=sflag, size = 0x4, scoped, tag = 'scoped memory for tpu_custom_call.1']
    #allocation7 [shape = 'u8[262144]{0}', space=vmem, size = 0x40000, scoped, tag = 'input window, operand 3, single buffered']
    #allocation8 [shape = 'u8[262144]{0}', space=vmem, size = 0x40000, scoped, tag = 'input window, operand 5, single buffered']
    #allocation9 [shape = 's32[1]{0}', space=sflag, size = 0x4, scoped, tag = 'scoped memory for tpu_custom_call.1']
    #allocation10 [shape = 'u8[4096]{0}', space=vmem, size = 0x1000, scoped, tag = 'output window, operand 0, single buffered']
    %12 = vsyncpa [#allocation3], 0
    %13 = vsyncpa [#allocation6], 0
    %14 = vsyncpa [#allocation9], 0
    %15 = vsyncpa [#allocation4], 0
    // Predicated region
    $region2: #{tpu_custom_call.1} parent=1 // pred_check
      _
    $region3: #{tpu_custom_call.1} parent=1 // pred_check_branch
      %17 = sbr.rel (0) target = $region5
    $region4: #{tpu_custom_call.1} parent=1 // pred_region
      %s19 = ssub.s32 1024, 1024
      %20 = vsyncadd [#allocation3], %s19
      %s22 = sshll.u32 [#allocation2], 4
      %s23 = int_to_ptr.vmem [resolvable:$true] %s22
      %25 = dma.hbm_to_vmem [thread:$0]  %s0, 1024, %s23, [#allocation3]
    $region5: #{tpu_custom_call.1} parent=1 // pred_fallthru
      _
    // Predicated region
    $region6: #{tpu_custom_call.1} parent=1 // pred_check
      _
    $region7: #{tpu_custom_call.1} parent=1 // pred_check_branch
      %27 = sbr.rel (0) target = $region9
    $region8: #{tpu_custom_call.1} parent=1 // pred_region
      %s29 = ssub.s32 16384, 16384
      %30 = vsyncadd [#allocation6], %s29
      %s31 = sshll.u32 [#allocation5], 4
      %s32 = int_to_ptr.vmem [resolvable:$true] %s31
      %37 = dma.hbm_to_vmem [thread:$0]  %s1, 16384, %s32, [#allocation6], 128, 128, 8
    $region9: #{tpu_custom_call.1} parent=1 // pred_fallthru
      _
    // Predicated region
    $region10: #{tpu_custom_call.1} parent=1 // pred_check
      _
    $region11: #{tpu_custom_call.1} parent=1 // pred_check_branch
      %39 = sbr.rel (0) target = $region13
    $region12: #{tpu_custom_call.1} parent=1 // pred_region
      _
    $region13: #{tpu_custom_call.1} parent=1 // pred_fallthru
      _
    // Predicated region
    $region14: #{tpu_custom_call.1} parent=1 // pred_check
      _
    $region15: #{tpu_custom_call.1} parent=1 // pred_check_branch
      %41 = sbr.rel (0) target = $region17
    $region16: #{tpu_custom_call.1} parent=1 // pred_region
      %s43 = ssub.s32 8192, 8192
      %44 = vsyncadd [#allocation6], %s43
      %s45 = sshll.u32 [#allocation7], 4
      %s46 = int_to_ptr.vmem [resolvable:$true] %s45
      %51 = dma.hbm_to_vmem [thread:$0]  %s3, 8192, %s46, [#allocation6], 512, 512, 32
    $region17: #{tpu_custom_call.1} parent=1 // pred_fallthru
      _
    // Predicated region
    $region18: #{tpu_custom_call.1} parent=1 // pred_check
      _
    $region19: #{tpu_custom_call.1} parent=1 // pred_check_branch
      %53 = sbr.rel (0) target = $region21
    $region20: #{tpu_custom_call.1} parent=1 // pred_region
      _
    $region21: #{tpu_custom_call.1} parent=1 // pred_fallthru
      _
    // Predicated region
    $region22: #{tpu_custom_call.1} parent=1 // pred_check
      _
    $region23: #{tpu_custom_call.1} parent=1 // pred_check_branch
      %55 = sbr.rel (0) target = $region25
    $region24: #{tpu_custom_call.1} parent=1 // pred_region
      %s57 = ssub.s32 8192, 8192
      %58 = vsyncadd [#allocation9], %s57
      %s59 = sshll.u32 [#allocation8], 4
      %s60 = int_to_ptr.vmem [resolvable:$true] %s59
      %65 = dma.hbm_to_vmem [thread:$0]  %s5, 8192, %s60, [#allocation9], 128, 128, 8
    $region25: #{tpu_custom_call.1} parent=1 // pred_fallthru
      _
    // Predicated region
    $region26: #{tpu_custom_call.1} parent=1 // pred_check
      _
    $region27: #{tpu_custom_call.1} parent=1 // pred_check_branch
      %67 = sbr.rel (0) target = $region29
    $region28: #{tpu_custom_call.1} parent=1 // pred_region
      _
    $region29: #{tpu_custom_call.1} parent=1 // pred_fallthru
      _
    // Predicated region
    $region30: #{tpu_custom_call.1} parent=1 // pred_check
      _
    $region31: #{tpu_custom_call.1} parent=1 // pred_check_branch
      %69 = sbr.rel (0) target = $region33
    $region32: #{tpu_custom_call.1} parent=1 // pred_region
      %70 = dma.done [#allocation3], 1024
    $region33: #{tpu_custom_call.1} parent=1 // pred_fallthru
      _
    // Predicated region
    $region34: #{tpu_custom_call.1} parent=1 // pred_check
      _
    $region35: #{tpu_custom_call.1} parent=1 // pred_check_branch
      %72 = sbr.rel (0) target = $region37
    $region36: #{tpu_custom_call.1} parent=1 // pred_region
      %73 = dma.done [#allocation6], 16384
    $region37: #{tpu_custom_call.1} parent=1 // pred_fallthru
      _
    // Predicated region
    $region38: #{tpu_custom_call.1} parent=1 // pred_check
      _
    $region39: #{tpu_custom_call.1} parent=1 // pred_check_branch
      %75 = sbr.rel (0) target = $region41
    $region40: #{tpu_custom_call.1} parent=1 // pred_region
      %76 = dma.done [#allocation6], 8192
    $region41: #{tpu_custom_call.1} parent=1 // pred_fallthru
      _
    // Predicated region
    $region42: #{tpu_custom_call.1} parent=1 // pred_check
      _
    $region43: #{tpu_custom_call.1} parent=1 // pred_check_branch
      %78 = sbr.rel (0) target = $region45
    $region44: #{tpu_custom_call.1} parent=1 // pred_region
      %79 = dma.done [#allocation9], 8192
    $region45: #{tpu_custom_call.1} parent=1 // pred_fallthru
      _
    %v80 = vld [vmem:[#allocation2] sm:$0xff]
    %v81 = vld [vmem:[#allocation2 + $0x8] sm:$0xff]
    %v82 = vld [vmem:[#allocation2 + $0x10] sm:$0xff]
    %v83 = vld [vmem:[#allocation2 + $0x18] sm:$0xff]
    %v84 = vld [vmem:[#allocation2 + $0x20] sm:$0xff]
    %v85 = vld [vmem:[#allocation2 + $0x28] sm:$0xff]
    %v86 = vld [vmem:[#allocation2 + $0x30] sm:$0xff]
    %v87 = vld [vmem:[#allocation2 + $0x38] sm:$0xff]
    %v88 = vld [vmem:[#allocation5] sm:$0xff]
    %v89 = vld [vmem:[#allocation5 + $0x8] sm:$0xff]
    %v90 = vld [vmem:[#allocation5 + $0x10] sm:$0xff]
    %v91 = vld [vmem:[#allocation5 + $0x18] sm:$0xff]
    %v92 = vld [vmem:[#allocation5 + $0x20] sm:$0xff]
    %v93 = vld [vmem:[#allocation5 + $0x28] sm:$0xff]
    %v94 = vld [vmem:[#allocation5 + $0x30] sm:$0xff]
    %v95 = vld [vmem:[#allocation5 + $0x38] sm:$0xff]
    %v96 = vld [vmem:[#allocation5 + $0x40] sm:$0xff]
    %v97 = vld [vmem:[#allocation5 + $0x48] sm:$0xff]
    %v98 = vld [vmem:[#allocation5 + $0x50] sm:$0xff]
    %v99 = vld [vmem:[#allocation5 + $0x58] sm:$0xff]
    %v100 = vld [vmem:[#allocation5 + $0x60] sm:$0xff]
    %v101 = vld [vmem:[#allocation5 + $0x68] sm:$0xff]
    %v102 = vld [vmem:[#allocation5 + $0x70] sm:$0xff]
    %v103 = vld [vmem:[#allocation5 + $0x78] sm:$0xff]
    %v104 = vld [vmem:[#allocation5 + $0x80] sm:$0xff]
    %v105 = vld [vmem:[#allocation5 + $0x88] sm:$0xff]
    %v106 = vld [vmem:[#allocation5 + $0x90] sm:$0xff]
    %v107 = vld [vmem:[#allocation5 + $0x98] sm:$0xff]
    %v108 = vld [vmem:[#allocation5 + $0xa0] sm:$0xff]
    %v109 = vld [vmem:[#allocation5 + $0xa8] sm:$0xff]
    %v110 = vld [vmem:[#allocation5 + $0xb0] sm:$0xff]
    %v111 = vld [vmem:[#allocation5 + $0xb8] sm:$0xff]
    %v112 = vld [vmem:[#allocation5 + $0xc0] sm:$0xff]
    %v113 = vld [vmem:[#allocation5 + $0xc8] sm:$0xff]
    %v114 = vld [vmem:[#allocation5 + $0xd0] sm:$0xff]
    %v115 = vld [vmem:[#allocation5 + $0xd8] sm:$0xff]
    %v116 = vld [vmem:[#allocation5 + $0xe0] sm:$0xff]
    %v117 = vld [vmem:[#allocation5 + $0xe8] sm:$0xff]
    %v118 = vld [vmem:[#allocation5 + $0xf0] sm:$0xff]
    %v119 = vld [vmem:[#allocation5 + $0xf8] sm:$0xff]
    %v120 = vld [vmem:[#allocation5 + $0x100] sm:$0xff]
    %v121 = vld [vmem:[#allocation5 + $0x108] sm:$0xff]
    %v122 = vld [vmem:[#allocation5 + $0x110] sm:$0xff]
    %v123 = vld [vmem:[#allocation5 + $0x118] sm:$0xff]
    %v124 = vld [vmem:[#allocation5 + $0x120] sm:$0xff]
    %v125 = vld [vmem:[#allocation5 + $0x128] sm:$0xff]
    %v126 = vld [vmem:[#allocation5 + $0x130] sm:$0xff]
    %v127 = vld [vmem:[#allocation5 + $0x138] sm:$0xff]
    %v128 = vld [vmem:[#allocation5 + $0x140] sm:$0xff]
    %v129 = vld [vmem:[#allocation5 + $0x148] sm:$0xff]
    %v130 = vld [vmem:[#allocation5 + $0x150] sm:$0xff]
    %v131 = vld [vmem:[#allocation5 + $0x158] sm:$0xff]
    %v132 = vld [vmem:[#allocation5 + $0x160] sm:$0xff]
    %v133 = vld [vmem:[#allocation5 + $0x168] sm:$0xff]
    %v134 = vld [vmem:[#allocation5 + $0x170] sm:$0xff]
    %v135 = vld [vmem:[#allocation5 + $0x178] sm:$0xff]
    %v136 = vld [vmem:[#allocation5 + $0x180] sm:$0xff]
    %v137 = vld [vmem:[#allocation5 + $0x188] sm:$0xff]
    %v138 = vld [vmem:[#allocation5 + $0x190] sm:$0xff]
    %v139 = vld [vmem:[#allocation5 + $0x198] sm:$0xff]
    %v140 = vld [vmem:[#allocation5 + $0x1a0] sm:$0xff]
    %v141 = vld [vmem:[#allocation5 + $0x1a8] sm:$0xff]
    %v142 = vld [vmem:[#allocation5 + $0x1b0] sm:$0xff]
    %v143 = vld [vmem:[#allocation5 + $0x1b8] sm:$0xff]
    %v144 = vld [vmem:[#allocation5 + $0x1c0] sm:$0xff]
    %v145 = vld [vmem:[#allocation5 + $0x1c8] sm:$0xff]
    %v146 = vld [vmem:[#allocation5 + $0x1d0] sm:$0xff]
    %v147 = vld [vmem:[#allocation5 + $0x1d8] sm:$0xff]
    %v148 = vld [vmem:[#allocation5 + $0x1e0] sm:$0xff]
    %v149 = vld [vmem:[#allocation5 + $0x1e8] sm:$0xff]
    %v150 = vld [vmem:[#allocation5 + $0x1f0] sm:$0xff]
    %v151 = vld [vmem:[#allocation5 + $0x1f8] sm:$0xff]
    %v152 = vld [vmem:[#allocation5 + $0x200] sm:$0xff]
    %v153 = vld [vmem:[#allocation5 + $0x208] sm:$0xff]
    %v154 = vld [vmem:[#allocation5 + $0x210] sm:$0xff]
    %v155 = vld [vmem:[#allocation5 + $0x218] sm:$0xff]
    %v156 = vld [vmem:[#allocation5 + $0x220] sm:$0xff]
    %v157 = vld [vmem:[#allocation5 + $0x228] sm:$0xff]
    %v158 = vld [vmem:[#allocation5 + $0x230] sm:$0xff]
    %v159 = vld [vmem:[#allocation5 + $0x238] sm:$0xff]
    %v160 = vld [vmem:[#allocation5 + $0x240] sm:$0xff]
    %v161 = vld [vmem:[#allocation5 + $0x248] sm:$0xff]
    %v162 = vld [vmem:[#allocation5 + $0x250] sm:$0xff]
    %v163 = vld [vmem:[#allocation5 + $0x258] sm:$0xff]
    %v164 = vld [vmem:[#allocation5 + $0x260] sm:$0xff]
    %v165 = vld [vmem:[#allocation5 + $0x268] sm:$0xff]
    %v166 = vld [vmem:[#allocation5 + $0x270] sm:$0xff]
    %v167 = vld [vmem:[#allocation5 + $0x278] sm:$0xff]
    %v168 = vld [vmem:[#allocation5 + $0x280] sm:$0xff]
    %v169 = vld [vmem:[#allocation5 + $0x288] sm:$0xff]
    %v170 = vld [vmem:[#allocation5 + $0x290] sm:$0xff]
    %v171 = vld [vmem:[#allocation5 + $0x298] sm:$0xff]
    %v172 = vld [vmem:[#allocation5 + $0x2a0] sm:$0xff]
    %v173 = vld [vmem:[#allocation5 + $0x2a8] sm:$0xff]
    %v174 = vld [vmem:[#allocation5 + $0x2b0] sm:$0xff]
    %v175 = vld [vmem:[#allocation5 + $0x2b8] sm:$0xff]
    %v176 = vld [vmem:[#allocation5 + $0x2c0] sm:$0xff]
    %v177 = vld [vmem:[#allocation5 + $0x2c8] sm:$0xff]
    %v178 = vld [vmem:[#allocation5 + $0x2d0] sm:$0xff]
    %v179 = vld [vmem:[#allocation5 + $0x2d8] sm:$0xff]
    %v180 = vld [vmem:[#allocation5 + $0x2e0] sm:$0xff]
    %v181 = vld [vmem:[#allocation5 + $0x2e8] sm:$0xff]
    %v182 = vld [vmem:[#allocation5 + $0x2f0] sm:$0xff]
    %v183 = vld [vmem:[#allocation5 + $0x2f8] sm:$0xff]
    %v184 = vld [vmem:[#allocation5 + $0x300] sm:$0xff]
    %v185 = vld [vmem:[#allocation5 + $0x308] sm:$0xff]
    %v186 = vld [vmem:[#allocation5 + $0x310] sm:$0xff]
    %v187 = vld [vmem:[#allocation5 + $0x318] sm:$0xff]
    %v188 = vld [vmem:[#allocation5 + $0x320] sm:$0xff]
    %v189 = vld [vmem:[#allocation5 + $0x328] sm:$0xff]
    %v190 = vld [vmem:[#allocation5 + $0x330] sm:$0xff]
    %v191 = vld [vmem:[#allocation5 + $0x338] sm:$0xff]
    %v192 = vld [vmem:[#allocation5 + $0x340] sm:$0xff]
    %v193 = vld [vmem:[#allocation5 + $0x348] sm:$0xff]
    %v194 = vld [vmem:[#allocation5 + $0x350] sm:$0xff]
    %v195 = vld [vmem:[#allocation5 + $0x358] sm:$0xff]
    %v196 = vld [vmem:[#allocation5 + $0x360] sm:$0xff]
    %v197 = vld [vmem:[#allocation5 + $0x368] sm:$0xff]
    %v198 = vld [vmem:[#allocation5 + $0x370] sm:$0xff]
    %v199 = vld [vmem:[#allocation5 + $0x378] sm:$0xff]
    %v200 = vld [vmem:[#allocation5 + $0x380] sm:$0xff]
    %v201 = vld [vmem:[#allocation5 + $0x388] sm:$0xff]
    %v202 = vld [vmem:[#allocation5 + $0x390] sm:$0xff]
    %v203 = vld [vmem:[#allocation5 + $0x398] sm:$0xff]
    %v204 = vld [vmem:[#allocation5 + $0x3a0] sm:$0xff]
    %v205 = vld [vmem:[#allocation5 + $0x3a8] sm:$0xff]
    %v206 = vld [vmem:[#allocation5 + $0x3b0] sm:$0xff]
    %v207 = vld [vmem:[#allocation5 + $0x3b8] sm:$0xff]
    %v208 = vld [vmem:[#allocation5 + $0x3c0] sm:$0xff]
    %v209 = vld [vmem:[#allocation5 + $0x3c8] sm:$0xff]
    %v210 = vld [vmem:[#allocation5 + $0x3d0] sm:$0xff]
    %v211 = vld [vmem:[#allocation5 + $0x3d8] sm:$0xff]
    %v212 = vld [vmem:[#allocation5 + $0x3e0] sm:$0xff]
    %v213 = vld [vmem:[#allocation5 + $0x3e8] sm:$0xff]
    %v214 = vld [vmem:[#allocation5 + $0x3f0] sm:$0xff]
    %v215 = vld [vmem:[#allocation5 + $0x3f8] sm:$0xff]
    %v216 = vld [vmem:[%s2] sm:$0x1]
    %v218 = vlaneseq
    %v219 = vshrl.u32 %v218, 7
    %v220 = vsub.s32 0, %v219
    %v221 = vrot.slane %v216, %v220
    %223 = vmatprep.subr.mxu0 0.0
    %224 = vmatpush1.msra.mxu0 %v88
    %225 = vmatprep.subr.mxu0 0.0
    %226 = vmatpush1.msra.mxu0 %v89
    %227 = vmatprep.subr.mxu0 0.0
    %228 = vmatpush1.msra.mxu0 %v90
    %229 = vmatprep.subr.mxu0 0.0
    %230 = vmatpush1.msra.mxu0 %v91
    %231 = vmatprep.subr.mxu0 0.0
    %232 = vmatpush1.msra.mxu0 %v92
    %233 = vmatprep.subr.mxu0 0.0
    %234 = vmatpush1.msra.mxu0 %v93
    %235 = vmatprep.subr.mxu0 0.0
    %236 = vmatpush1.msra.mxu0 %v94
    %237 = vmatprep.subr.mxu0 0.0
    %238 = vmatpush1.msra.mxu0 %v95
    %239 = vmatprep.subr.mxu0 0.0
    %240 = vmatpush1.msra.mxu0 %v96
    %241 = vmatprep.subr.mxu0 0.0
    %242 = vmatpush1.msra.mxu0 %v97
    %243 = vmatprep.subr.mxu0 0.0
    %244 = vmatpush1.msra.mxu0 %v98
    %245 = vmatprep.subr.mxu0 0.0
    %246 = vmatpush1.msra.mxu0 %v99
    %247 = vmatprep.subr.mxu0 0.0
    %248 = vmatpush1.msra.mxu0 %v100
    %249 = vmatprep.subr.mxu0 0.0
    %250 = vmatpush1.msra.mxu0 %v101
    %251 = vmatprep.subr.mxu0 0.0
    %252 = vmatpush1.msra.mxu0 %v102
    %253 = vmatprep.subr.mxu0 0.0
    %254 = vmatpush1.msra.mxu0 %v103
    %255 = vmatprep.subr.mxu0 0.0
    %256 = vmatpush1.msra.mxu0 %v104
    %257 = vmatprep.subr.mxu0 0.0
    %258 = vmatpush1.msra.mxu0 %v105
    %259 = vmatprep.subr.mxu0 0.0
    %260 = vmatpush1.msra.mxu0 %v106
    %261 = vmatprep.subr.mxu0 0.0
    %262 = vmatpush1.msra.mxu0 %v107
    %263 = vmatprep.subr.mxu0 0.0
    %264 = vmatpush1.msra.mxu0 %v108
    %265 = vmatprep.subr.mxu0 0.0
    %266 = vmatpush1.msra.mxu0 %v109
    %267 = vmatprep.subr.mxu0 0.0
    %268 = vmatpush1.msra.mxu0 %v110
    %269 = vmatprep.subr.mxu0 0.0
    %270 = vmatpush1.msra.mxu0 %v111
    %271 = vmatprep.subr.mxu0 0.0
    %272 = vmatpush1.msra.mxu0 %v112
    %273 = vmatprep.subr.mxu0 0.0
    %274 = vmatpush1.msra.mxu0 %v113
    %275 = vmatprep.subr.mxu0 0.0
    %276 = vmatpush1.msra.mxu0 %v114
    %277 = vmatprep.subr.mxu0 0.0
    %278 = vmatpush1.msra.mxu0 %v115
    %279 = vmatprep.subr.mxu0 0.0
    %280 = vmatpush1.msra.mxu0 %v116
    %281 = vmatprep.subr.mxu0 0.0
    %282 = vmatpush1.msra.mxu0 %v117
    %283 = vmatprep.subr.mxu0 0.0
    %284 = vmatpush1.msra.mxu0 %v118
    %285 = vmatprep.subr.mxu0 0.0
    %286 = vmatpush1.msra.mxu0 %v119
    %287 = vmatprep.mubr.f32.mxu0 %v81
    %288 = vmatmul.mubr.f32.gmra.mrb[0].mxu0 %v80
    %v289 = vpop.f32.mrb[0].mxu0
    %v290 = vadd.f32 %v221, %v289
    %v291 = vpop.f32.mrb[0].mxu0
    %292 = vdwg.mxu0
    %293 = vmatprep.subr.mxu0 0.0
    %294 = vmatpush1.msra.mxu0 %v120
    %295 = vmatprep.subr.mxu0 0.0
    %296 = vmatpush1.msra.mxu0 %v121
    %297 = vmatprep.subr.mxu0 0.0
    %298 = vmatpush1.msra.mxu0 %v122
    %299 = vmatprep.subr.mxu0 0.0
    %300 = vmatpush1.msra.mxu0 %v123
    %301 = vmatprep.subr.mxu0 0.0
    %302 = vmatpush1.msra.mxu0 %v124
    %303 = vmatprep.subr.mxu0 0.0
    %304 = vmatpush1.msra.mxu0 %v125
    %305 = vmatprep.subr.mxu0 0.0
    %306 = vmatpush1.msra.mxu0 %v126
    %307 = vmatprep.subr.mxu0 0.0
    %308 = vmatpush1.msra.mxu0 %v127
    %309 = vmatprep.subr.mxu0 0.0
    %310 = vmatpush1.msra.mxu0 %v128
    %311 = vmatprep.subr.mxu0 0.0
    %312 = vmatpush1.msra.mxu0 %v129
    %313 = vmatprep.subr.mxu0 0.0
    %314 = vmatpush1.msra.mxu0 %v130
    %315 = vmatprep.subr.mxu0 0.0
    %316 = vmatpush1.msra.mxu0 %v131
    %317 = vmatprep.subr.mxu0 0.0
    %318 = vmatpush1.msra.mxu0 %v132
    %319 = vmatprep.subr.mxu0 0.0
    %320 = vmatpush1.msra.mxu0 %v133
    %321 = vmatprep.subr.mxu0 0.0
    %322 = vmatpush1.msra.mxu0 %v134
    %323 = vmatprep.subr.mxu0 0.0
    %324 = vmatpush1.msra.mxu0 %v135
    %325 = vmatprep.subr.mxu0 0.0
    %326 = vmatpush1.msra.mxu0 %v136
    %327 = vmatprep.subr.mxu0 0.0
    %328 = vmatpush1.msra.mxu0 %v137
    %329 = vmatprep.subr.mxu0 0.0
    %330 = vmatpush1.msra.mxu0 %v138
    %331 = vmatprep.subr.mxu0 0.0
    %332 = vmatpush1.msra.mxu0 %v139
    %333 = vmatprep.subr.mxu0 0.0
    %334 = vmatpush1.msra.mxu0 %v140
    %335 = vmatprep.subr.mxu0 0.0
    %336 = vmatpush1.msra.mxu0 %v141
    %337 = vmatprep.subr.mxu0 0.0
    %338 = vmatpush1.msra.mxu0 %v142
    %339 = vmatprep.subr.mxu0 0.0
    %340 = vmatpush1.msra.mxu0 %v143
    %341 = vmatprep.subr.mxu0 0.0
    %342 = vmatpush1.msra.mxu0 %v144
    %343 = vmatprep.subr.mxu0 0.0
    %344 = vmatpush1.msra.mxu0 %v145
    %345 = vmatprep.subr.mxu0 0.0
    %346 = vmatpush1.msra.mxu0 %v146
    %347 = vmatprep.subr.mxu0 0.0
    %348 = vmatpush1.msra.mxu0 %v147
    %349 = vmatprep.subr.mxu0 0.0
    %350 = vmatpush1.msra.mxu0 %v148
    %351 = vmatprep.subr.mxu0 0.0
    %352 = vmatpush1.msra.mxu0 %v149
    %353 = vmatprep.subr.mxu0 0.0
    %354 = vmatpush1.msra.mxu0 %v150
    %355 = vmatprep.subr.mxu0 0.0
    %356 = vmatpush1.msra.mxu0 %v151
    %357 = vmatprep.mubr.f32.mxu0 %v83
    %358 = vmatmul.mubr.f32.gmra.mrb[0].mxu0 %v82
    %v359 = vpop.f32.mrb[0].mxu0
    %v360 = vadd.f32 %v290, %v359
    %v361 = vpop.f32.mrb[0].mxu0
    %362 = vdwg.mxu0
    %363 = vmatprep.subr.mxu0 0.0
    %364 = vmatpush1.msra.mxu0 %v152
    %365 = vmatprep.subr.mxu0 0.0
    %366 = vmatpush1.msra.mxu0 %v153
    %367 = vmatprep.subr.mxu0 0.0
    %368 = vmatpush1.msra.mxu0 %v154
    %369 = vmatprep.subr.mxu0 0.0
    %370 = vmatpush1.msra.mxu0 %v155
    %371 = vmatprep.subr.mxu0 0.0
    %372 = vmatpush1.msra.mxu0 %v156
    %373 = vmatprep.subr.mxu0 0.0
    %374 = vmatpush1.msra.mxu0 %v157
    %375 = vmatprep.subr.mxu0 0.0
    %376 = vmatpush1.msra.mxu0 %v158
    %377 = vmatprep.subr.mxu0 0.0
    %378 = vmatpush1.msra.mxu0 %v159
    %379 = vmatprep.subr.mxu0 0.0
    %380 = vmatpush1.msra.mxu0 %v160
    %381 = vmatprep.subr.mxu0 0.0
    %382 = vmatpush1.msra.mxu0 %v161
    %383 = vmatprep.subr.mxu0 0.0
    %384 = vmatpush1.msra.mxu0 %v162
    %385 = vmatprep.subr.mxu0 0.0
    %386 = vmatpush1.msra.mxu0 %v163
    %387 = vmatprep.subr.mxu0 0.0
    %388 = vmatpush1.msra.mxu0 %v164
    %389 = vmatprep.subr.mxu0 0.0
    %390 = vmatpush1.msra.mxu0 %v165
    %391 = vmatprep.subr.mxu0 0.0
    %392 = vmatpush1.msra.mxu0 %v166
    %393 = vmatprep.subr.mxu0 0.0
    %394 = vmatpush1.msra.mxu0 %v167
    %395 = vmatprep.subr.mxu0 0.0
    %396 = vmatpush1.msra.mxu0 %v168
    %397 = vmatprep.subr.mxu0 0.0
    %398 = vmatpush1.msra.mxu0 %v169
    %399 = vmatprep.subr.mxu0 0.0
    %400 = vmatpush1.msra.mxu0 %v170
    %401 = vmatprep.subr.mxu0 0.0
    %402 = vmatpush1.msra.mxu0 %v171
    %403 = vmatprep.subr.mxu0 0.0
    %404 = vmatpush1.msra.mxu0 %v172
    %405 = vmatprep.subr.mxu0 0.0
    %406 = vmatpush1.msra.mxu0 %v173
    %407 = vmatprep.subr.mxu0 0.0
    %408 = vmatpush1.msra.mxu0 %v174
    %409 = vmatprep.subr.mxu0 0.0
    %410 = vmatpush1.msra.mxu0 %v175
    %411 = vmatprep.subr.mxu0 0.0
    %412 = vmatpush1.msra.mxu0 %v176
    %413 = vmatprep.subr.mxu0 0.0
    %414 = vmatpush1.msra.mxu0 %v177
    %415 = vmatprep.subr.mxu0 0.0
    %416 = vmatpush1.msra.mxu0 %v178
    %417 = vmatprep.subr.mxu0 0.0
    %418 = vmatpush1.msra.mxu0 %v179
    %419 = vmatprep.subr.mxu0 0.0
    %420 = vmatpush1.msra.mxu0 %v180
    %421 = vmatprep.subr.mxu0 0.0
    %422 = vmatpush1.msra.mxu0 %v181
    %423 = vmatprep.subr.mxu0 0.0
    %424 = vmatpush1.msra.mxu0 %v182
    %425 = vmatprep.subr.mxu0 0.0
    %426 = vmatpush1.msra.mxu0 %v183
    %427 = vmatprep.mubr.f32.mxu0 %v85
    %428 = vmatmul.mubr.f32.gmra.mrb[0].mxu0 %v84
    %v429 = vpop.f32.mrb[0].mxu0
    %v430 = vadd.f32 %v360, %v429
    %v431 = vpop.f32.mrb[0].mxu0
    %432 = vdwg.mxu0
    %433 = vmatprep.subr.mxu0 0.0
    %434 = vmatpush1.msra.mxu0 %v184
    %435 = vmatprep.subr.mxu0 0.0
    %436 = vmatpush1.msra.mxu0 %v185
    %437 = vmatprep.subr.mxu0 0.0
    %438 = vmatpush1.msra.mxu0 %v186
    %439 = vmatprep.subr.mxu0 0.0
    %440 = vmatpush1.msra.mxu0 %v187
    %441 = vmatprep.subr.mxu0 0.0
    %442 = vmatpush1.msra.mxu0 %v188
    %443 = vmatprep.subr.mxu0 0.0
    %444 = vmatpush1.msra.mxu0 %v189
    %445 = vmatprep.subr.mxu0 0.0
    %446 = vmatpush1.msra.mxu0 %v190
    %447 = vmatprep.subr.mxu0 0.0
    %448 = vmatpush1.msra.mxu0 %v191
    %449 = vmatprep.subr.mxu0 0.0
    %450 = vmatpush1.msra.mxu0 %v192
    %451 = vmatprep.subr.mxu0 0.0
    %452 = vmatpush1.msra.mxu0 %v193
    %453 = vmatprep.subr.mxu0 0.0
    %454 = vmatpush1.msra.mxu0 %v194
    %455 = vmatprep.subr.mxu0 0.0
    %456 = vmatpush1.msra.mxu0 %v195
    %457 = vmatprep.subr.mxu0 0.0
    %458 = vmatpush1.msra.mxu0 %v196
    %459 = vmatprep.subr.mxu0 0.0
    %460 = vmatpush1.msra.mxu0 %v197
    %461 = vmatprep.subr.mxu0 0.0
    %462 = vmatpush1.msra.mxu0 %v198
    %463 = vmatprep.subr.mxu0 0.0
    %464 = vmatpush1.msra.mxu0 %v199
    %465 = vmatprep.subr.mxu0 0.0
    %466 = vmatpush1.msra.mxu0 %v200
    %467 = vmatprep.subr.mxu0 0.0
    %468 = vmatpush1.msra.mxu0 %v201
    %469 = vmatprep.subr.mxu0 0.0
    %470 = vmatpush1.msra.mxu0 %v202
    %471 = vmatprep.subr.mxu0 0.0
    %472 = vmatpush1.msra.mxu0 %v203
    %473 = vmatprep.subr.mxu0 0.0
    %474 = vmatpush1.msra.mxu0 %v204
    %475 = vmatprep.subr.mxu0 0.0
    %476 = vmatpush1.msra.mxu0 %v205
    %477 = vmatprep.subr.mxu0 0.0
    %478 = vmatpush1.msra.mxu0 %v206
    %479 = vmatprep.subr.mxu0 0.0
    %480 = vmatpush1.msra.mxu0 %v207
    %481 = vmatprep.subr.mxu0 0.0
    %482 = vmatpush1.msra.mxu0 %v208
    %483 = vmatprep.subr.mxu0 0.0
    %484 = vmatpush1.msra.mxu0 %v209
    %485 = vmatprep.subr.mxu0 0.0
    %486 = vmatpush1.msra.mxu0 %v210
    %487 = vmatprep.subr.mxu0 0.0
    %488 = vmatpush1.msra.mxu0 %v211
    %489 = vmatprep.subr.mxu0 0.0
    %490 = vmatpush1.msra.mxu0 %v212
    %491 = vmatprep.subr.mxu0 0.0
    %492 = vmatpush1.msra.mxu0 %v213
    %493 = vmatprep.subr.mxu0 0.0
    %494 = vmatpush1.msra.mxu0 %v214
    %495 = vmatprep.subr.mxu0 0.0
    %496 = vmatpush1.msra.mxu0 %v215
    %497 = vmatprep.mubr.f32.mxu0 %v87
    %498 = vmatmul.mubr.f32.gmra.mrb[0].mxu0 %v86
    %v499 = vpop.f32.mrb[0].mxu0
    %v500 = vadd.f32 %v430, %v499
    %v501 = vpop.f32.mrb[0].mxu0
    %502 = vdwg.mxu0
    %v503 = vmax.f32 %v500, 0.0
    %v504 = vld [vmem:[#allocation7] sm:$0xff]
    %v505 = vld [vmem:[#allocation7 + $0x8] sm:$0xff]
    %v506 = vld [vmem:[#allocation7 + $0x10] sm:$0xff]
    %v507 = vld [vmem:[#allocation7 + $0x18] sm:$0xff]
    %v508 = vld [vmem:[#allocation7 + $0x20] sm:$0xff]
    %v509 = vld [vmem:[#allocation7 + $0x28] sm:$0xff]
    %v510 = vld [vmem:[#allocation7 + $0x30] sm:$0xff]
    %v511 = vld [vmem:[#allocation7 + $0x38] sm:$0xff]
    %v512 = vld [vmem:[#allocation7 + $0x40] sm:$0xff]
    %v513 = vld [vmem:[#allocation7 + $0x48] sm:$0xff]
    %v514 = vld [vmem:[#allocation7 + $0x50] sm:$0xff]
    %v515 = vld [vmem:[#allocation7 + $0x58] sm:$0xff]
    %v516 = vld [vmem:[#allocation7 + $0x60] sm:$0xff]
    %v517 = vld [vmem:[#allocation7 + $0x68] sm:$0xff]
    %v518 = vld [vmem:[#allocation7 + $0x70] sm:$0xff]
    %v519 = vld [vmem:[#allocation7 + $0x78] sm:$0xff]
    %v520 = vld [vmem:[#allocation7 + $0x80] sm:$0xff]
    %v521 = vld [vmem:[#allocation7 + $0x88] sm:$0xff]
    %v522 = vld [vmem:[#allocation7 + $0x90] sm:$0xff]
    %v523 = vld [vmem:[#allocation7 + $0x98] sm:$0xff]
    %v524 = vld [vmem:[#allocation7 + $0xa0] sm:$0xff]
    %v525 = vld [vmem:[#allocation7 + $0xa8] sm:$0xff]
    %v526 = vld [vmem:[#allocation7 + $0xb0] sm:$0xff]
    %v527 = vld [vmem:[#allocation7 + $0xb8] sm:$0xff]
    %v528 = vld [vmem:[#allocation7 + $0xc0] sm:$0xff]
    %v529 = vld [vmem:[#allocation7 + $0xc8] sm:$0xff]
    %v530 = vld [vmem:[#allocation7 + $0xd0] sm:$0xff]
    %v531 = vld [vmem:[#allocation7 + $0xd8] sm:$0xff]
    %v532 = vld [vmem:[#allocation7 + $0xe0] sm:$0xff]
    %v533 = vld [vmem:[#allocation7 + $0xe8] sm:$0xff]
    %v534 = vld [vmem:[#allocation7 + $0xf0] sm:$0xff]
    %v535 = vld [vmem:[#allocation7 + $0xf8] sm:$0xff]
    %v536 = vld [vmem:[#allocation7 + $0x100] sm:$0xff]
    %v537 = vld [vmem:[#allocation7 + $0x108] sm:$0xff]
    %v538 = vld [vmem:[#allocation7 + $0x110] sm:$0xff]
    %v539 = vld [vmem:[#allocation7 + $0x118] sm:$0xff]
    %v540 = vld [vmem:[#allocation7 + $0x120] sm:$0xff]
    %v541 = vld [vmem:[#allocation7 + $0x128] sm:$0xff]
    %v542 = vld [vmem:[#allocation7 + $0x130] sm:$0xff]
    %v543 = vld [vmem:[#allocation7 + $0x138] sm:$0xff]
    %v544 = vld [vmem:[#allocation7 + $0x140] sm:$0xff]
    %v545 = vld [vmem:[#allocation7 + $0x148] sm:$0xff]
    %v546 = vld [vmem:[#allocation7 + $0x150] sm:$0xff]
    %v547 = vld [vmem:[#allocation7 + $0x158] sm:$0xff]
    %v548 = vld [vmem:[#allocation7 + $0x160] sm:$0xff]
    %v549 = vld [vmem:[#allocation7 + $0x168] sm:$0xff]
    %v550 = vld [vmem:[#allocation7 + $0x170] sm:$0xff]
    %v551 = vld [vmem:[#allocation7 + $0x178] sm:$0xff]
    %v552 = vld [vmem:[#allocation7 + $0x180] sm:$0xff]
    %v553 = vld [vmem:[#allocation7 + $0x188] sm:$0xff]
    %v554 = vld [vmem:[#allocation7 + $0x190] sm:$0xff]
    %v555 = vld [vmem:[#allocation7 + $0x198] sm:$0xff]
    %v556 = vld [vmem:[#allocation7 + $0x1a0] sm:$0xff]
    %v557 = vld [vmem:[#allocation7 + $0x1a8] sm:$0xff]
    %v558 = vld [vmem:[#allocation7 + $0x1b0] sm:$0xff]
    %v559 = vld [vmem:[#allocation7 + $0x1b8] sm:$0xff]
    %v560 = vld [vmem:[#allocation7 + $0x1c0] sm:$0xff]
    %v561 = vld [vmem:[#allocation7 + $0x1c8] sm:$0xff]
    %v562 = vld [vmem:[#allocation7 + $0x1d0] sm:$0xff]
    %v563 = vld [vmem:[#allocation7 + $0x1d8] sm:$0xff]
    %v564 = vld [vmem:[#allocation7 + $0x1e0] sm:$0xff]
    %v565 = vld [vmem:[#allocation7 + $0x1e8] sm:$0xff]
    %v566 = vld [vmem:[#allocation7 + $0x1f0] sm:$0xff]
    %v567 = vld [vmem:[#allocation7 + $0x1f8] sm:$0xff]
    %v568 = vld [vmem:[%s4] sm:$0xf]
    %v570 = vlaneseq
    %v571 = vshrl.u32 %v570, 7
    %v572 = vsub.s32 0, %v571
    %v573 = vrot.slane %v568, %v572
    %v574 = vlaneseq
    %v575 = vshrl.u32 %v574, 7
    %v576 = vsub.s32 1, %v575
    %v577 = vrot.slane %v568, %v576
    %v578 = vlaneseq
    %v579 = vshrl.u32 %v578, 7
    %v580 = vsub.s32 2, %v579
    %v581 = vrot.slane %v568, %v580
    %v582 = vlaneseq
    %v583 = vshrl.u32 %v582, 7
    %v584 = vsub.s32 3, %v583
    %v585 = vrot.slane %v568, %v584
    %590 = vmatprep.subr.mxu0 %v505
    %591 = vmatpush1.msra.mxu0 %v504
    %592 = vmatprep.subr.mxu0 %v509
    %593 = vmatpush1.msra.mxu0 %v508
    %594 = vmatprep.subr.mxu0 %v513
    %595 = vmatpush1.msra.mxu0 %v512
    %596 = vmatprep.subr.mxu0 %v517
    %597 = vmatpush1.msra.mxu0 %v516
    %598 = vmatprep.subr.mxu0 %v521
    %599 = vmatpush1.msra.mxu0 %v520
    %600 = vmatprep.subr.mxu0 %v525
    %601 = vmatpush1.msra.mxu0 %v524
    %602 = vmatprep.subr.mxu0 %v529
    %603 = vmatpush1.msra.mxu0 %v528
    %604 = vmatprep.subr.mxu0 %v533
    %605 = vmatpush1.msra.mxu0 %v532
    %606 = vmatprep.subr.mxu0 %v537
    %607 = vmatpush1.msra.mxu0 %v536
    %608 = vmatprep.subr.mxu0 %v541
    %609 = vmatpush1.msra.mxu0 %v540
    %610 = vmatprep.subr.mxu0 %v545
    %611 = vmatpush1.msra.mxu0 %v544
    %612 = vmatprep.subr.mxu0 %v549
    %613 = vmatpush1.msra.mxu0 %v548
    %614 = vmatprep.subr.mxu0 %v553
    %615 = vmatpush1.msra.mxu0 %v552
    %616 = vmatprep.subr.mxu0 %v557
    %617 = vmatpush1.msra.mxu0 %v556
    %618 = vmatprep.subr.mxu0 %v561
    %619 = vmatpush1.msra.mxu0 %v560
    %620 = vmatprep.subr.mxu0 %v565
    %621 = vmatpush1.msra.mxu0 %v564
    %622 = vmatprep.subr.mxu0 0.0
    %623 = vmatpush1.msra.mxu0 0.0
    %624 = vmatprep.subr.mxu0 0.0
    %625 = vmatpush1.msra.mxu0 0.0
    %626 = vmatprep.subr.mxu0 0.0
    %627 = vmatpush1.msra.mxu0 0.0
    %628 = vmatprep.subr.mxu0 0.0
    %629 = vmatpush1.msra.mxu0 0.0
    %630 = vmatprep.subr.mxu0 0.0
    %631 = vmatpush1.msra.mxu0 0.0
    %632 = vmatprep.subr.mxu0 0.0
    %633 = vmatpush1.msra.mxu0 0.0
    %634 = vmatprep.subr.mxu0 0.0
    %635 = vmatpush1.msra.mxu0 0.0
    %636 = vmatprep.subr.mxu0 0.0
    %637 = vmatpush1.msra.mxu0 0.0
    %638 = vmatprep.subr.mxu0 0.0
    %639 = vmatpush1.msra.mxu0 0.0
    %640 = vmatprep.subr.mxu0 0.0
    %641 = vmatpush1.msra.mxu0 0.0
    %642 = vmatprep.subr.mxu0 0.0
    %643 = vmatpush1.msra.mxu0 0.0
    %644 = vmatprep.subr.mxu0 0.0
    %645 = vmatpush1.msra.mxu0 0.0
    %646 = vmatprep.subr.mxu0 0.0
    %647 = vmatpush1.msra.mxu0 0.0
    %648 = vmatprep.subr.mxu0 0.0
    %649 = vmatpush1.msra.mxu0 0.0
    %650 = vmatprep.subr.mxu0 0.0
    %651 = vmatpush1.msra.mxu0 0.0
    %652 = vmatprep.subr.mxu0 0.0
    %653 = vmatpush1.msra.mxu0 0.0
    %654 = vmatprep.mubr.f32.mxu0 0.0
    %655 = vmatmul.mubr.f32.gmra.mrb[0].mxu0 %v503
    %v656 = vpop.f32.mrb[0].mxu0
    %v657 = vadd.f32 %v573, %v656
    %v658 = vpop.f32.mrb[0].mxu0
    %v659 = vadd.f32 %v577, %v658
    %660 = vdwg.mxu0
    %661 = vmatprep.subr.mxu0 %v507
    %662 = vmatpush1.msra.mxu0 %v506
    %663 = vmatprep.subr.mxu0 %v511
    %664 = vmatpush1.msra.mxu0 %v510
    %665 = vmatprep.subr.mxu0 %v515
    %666 = vmatpush1.msra.mxu0 %v514
    %667 = vmatprep.subr.mxu0 %v519
    %668 = vmatpush1.msra.mxu0 %v518
    %669 = vmatprep.subr.mxu0 %v523
    %670 = vmatpush1.msra.mxu0 %v522
    %671 = vmatprep.subr.mxu0 %v527
    %672 = vmatpush1.msra.mxu0 %v526
    %673 = vmatprep.subr.mxu0 %v531
    %674 = vmatpush1.msra.mxu0 %v530
    %675 = vmatprep.subr.mxu0 %v535
    %676 = vmatpush1.msra.mxu0 %v534
    %677 = vmatprep.subr.mxu0 %v539
    %678 = vmatpush1.msra.mxu0 %v538
    %679 = vmatprep.subr.mxu0 %v543
    %680 = vmatpush1.msra.mxu0 %v542
    %681 = vmatprep.subr.mxu0 %v547
    %682 = vmatpush1.msra.mxu0 %v546
    %683 = vmatprep.subr.mxu0 %v551
    %684 = vmatpush1.msra.mxu0 %v550
    %685 = vmatprep.subr.mxu0 %v555
    %686 = vmatpush1.msra.mxu0 %v554
    %687 = vmatprep.subr.mxu0 %v559
    %688 = vmatpush1.msra.mxu0 %v558
    %689 = vmatprep.subr.mxu0 %v563
    %690 = vmatpush1.msra.mxu0 %v562
    %691 = vmatprep.subr.mxu0 %v567
    %692 = vmatpush1.msra.mxu0 %v566
    %693 = vmatprep.subr.mxu0 0.0
    %694 = vmatpush1.msra.mxu0 0.0
    %695 = vmatprep.subr.mxu0 0.0
    %696 = vmatpush1.msra.mxu0 0.0
    %697 = vmatprep.subr.mxu0 0.0
    %698 = vmatpush1.msra.mxu0 0.0
    %699 = vmatprep.subr.mxu0 0.0
    %700 = vmatpush1.msra.mxu0 0.0
    %701 = vmatprep.subr.mxu0 0.0
    %702 = vmatpush1.msra.mxu0 0.0
    %703 = vmatprep.subr.mxu0 0.0
    %704 = vmatpush1.msra.mxu0 0.0
    %705 = vmatprep.subr.mxu0 0.0
    %706 = vmatpush1.msra.mxu0 0.0
    %707 = vmatprep.subr.mxu0 0.0
    %708 = vmatpush1.msra.mxu0 0.0
    %709 = vmatprep.subr.mxu0 0.0
    %710 = vmatpush1.msra.mxu0 0.0
    %711 = vmatprep.subr.mxu0 0.0
    %712 = vmatpush1.msra.mxu0 0.0
    %713 = vmatprep.subr.mxu0 0.0
    %714 = vmatpush1.msra.mxu0 0.0
    %715 = vmatprep.subr.mxu0 0.0
    %716 = vmatpush1.msra.mxu0 0.0
    %717 = vmatprep.subr.mxu0 0.0
    %718 = vmatpush1.msra.mxu0 0.0
    %719 = vmatprep.subr.mxu0 0.0
    %720 = vmatpush1.msra.mxu0 0.0
    %721 = vmatprep.subr.mxu0 0.0
    %722 = vmatpush1.msra.mxu0 0.0
    %723 = vmatprep.subr.mxu0 0.0
    %724 = vmatpush1.msra.mxu0 0.0
    %725 = vmatprep.mubr.f32.mxu0 0.0
    %726 = vmatmul.mubr.f32.gmra.mrb[0].mxu0 %v503
    %v727 = vpop.f32.mrb[0].mxu0
    %v728 = vadd.f32 %v581, %v727
    %v729 = vpop.f32.mrb[0].mxu0
    %v730 = vadd.f32 %v585, %v729
    %731 = vdwg.mxu0
    %v732 = vmax.f32 %v657, 0.0
    %v733 = vmax.f32 %v659, 0.0
    %v734 = vmax.f32 %v728, 0.0
    %v735 = vmax.f32 %v730, 0.0
    %v736 = vld [vmem:[#allocation8] sm:$0xff]
    %v737 = vld [vmem:[#allocation8 + $0x8] sm:$0xff]
    %v738 = vld [vmem:[#allocation8 + $0x10] sm:$0xff]
    %v739 = vld [vmem:[#allocation8 + $0x18] sm:$0xff]
    %v740 = vld [vmem:[#allocation8 + $0x20] sm:$0xff]
    %v741 = vld [vmem:[#allocation8 + $0x28] sm:$0xff]
    %v742 = vld [vmem:[#allocation8 + $0x30] sm:$0xff]
    %v743 = vld [vmem:[#allocation8 + $0x38] sm:$0xff]
    %v744 = vld [vmem:[#allocation8 + $0x40] sm:$0xff]
    %v745 = vld [vmem:[#allocation8 + $0x48] sm:$0xff]
    %v746 = vld [vmem:[#allocation8 + $0x50] sm:$0xff]
    %v747 = vld [vmem:[#allocation8 + $0x58] sm:$0xff]
    %v748 = vld [vmem:[#allocation8 + $0x60] sm:$0xff]
    %v749 = vld [vmem:[#allocation8 + $0x68] sm:$0xff]
    %v750 = vld [vmem:[#allocation8 + $0x70] sm:$0xff]
    %v751 = vld [vmem:[#allocation8 + $0x78] sm:$0xff]
    %v752 = vld [vmem:[#allocation8 + $0x80] sm:$0xff]
    %v753 = vld [vmem:[#allocation8 + $0x88] sm:$0xff]
    %v754 = vld [vmem:[#allocation8 + $0x90] sm:$0xff]
    %v755 = vld [vmem:[#allocation8 + $0x98] sm:$0xff]
    %v756 = vld [vmem:[#allocation8 + $0xa0] sm:$0xff]
    %v757 = vld [vmem:[#allocation8 + $0xa8] sm:$0xff]
    %v758 = vld [vmem:[#allocation8 + $0xb0] sm:$0xff]
    %v759 = vld [vmem:[#allocation8 + $0xb8] sm:$0xff]
    %v760 = vld [vmem:[#allocation8 + $0xc0] sm:$0xff]
    %v761 = vld [vmem:[#allocation8 + $0xc8] sm:$0xff]
    %v762 = vld [vmem:[#allocation8 + $0xd0] sm:$0xff]
    %v763 = vld [vmem:[#allocation8 + $0xd8] sm:$0xff]
    %v764 = vld [vmem:[#allocation8 + $0xe0] sm:$0xff]
    %v765 = vld [vmem:[#allocation8 + $0xe8] sm:$0xff]
    %v766 = vld [vmem:[#allocation8 + $0xf0] sm:$0xff]
    %v767 = vld [vmem:[#allocation8 + $0xf8] sm:$0xff]
    %v768 = vld [vmem:[#allocation8 + $0x100] sm:$0xff]
    %v769 = vld [vmem:[#allocation8 + $0x108] sm:$0xff]
    %v770 = vld [vmem:[#allocation8 + $0x110] sm:$0xff]
    %v771 = vld [vmem:[#allocation8 + $0x118] sm:$0xff]
    %v772 = vld [vmem:[#allocation8 + $0x120] sm:$0xff]
    %v773 = vld [vmem:[#allocation8 + $0x128] sm:$0xff]
    %v774 = vld [vmem:[#allocation8 + $0x130] sm:$0xff]
    %v775 = vld [vmem:[#allocation8 + $0x138] sm:$0xff]
    %v776 = vld [vmem:[#allocation8 + $0x140] sm:$0xff]
    %v777 = vld [vmem:[#allocation8 + $0x148] sm:$0xff]
    %v778 = vld [vmem:[#allocation8 + $0x150] sm:$0xff]
    %v779 = vld [vmem:[#allocation8 + $0x158] sm:$0xff]
    %v780 = vld [vmem:[#allocation8 + $0x160] sm:$0xff]
    %v781 = vld [vmem:[#allocation8 + $0x168] sm:$0xff]
    %v782 = vld [vmem:[#allocation8 + $0x170] sm:$0xff]
    %v783 = vld [vmem:[#allocation8 + $0x178] sm:$0xff]
    %v784 = vld [vmem:[#allocation8 + $0x180] sm:$0xff]
    %v785 = vld [vmem:[#allocation8 + $0x188] sm:$0xff]
    %v786 = vld [vmem:[#allocation8 + $0x190] sm:$0xff]
    %v787 = vld [vmem:[#allocation8 + $0x198] sm:$0xff]
    %v788 = vld [vmem:[#allocation8 + $0x1a0] sm:$0xff]
    %v789 = vld [vmem:[#allocation8 + $0x1a8] sm:$0xff]
    %v790 = vld [vmem:[#allocation8 + $0x1b0] sm:$0xff]
    %v791 = vld [vmem:[#allocation8 + $0x1b8] sm:$0xff]
    %v792 = vld [vmem:[#allocation8 + $0x1c0] sm:$0xff]
    %v793 = vld [vmem:[#allocation8 + $0x1c8] sm:$0xff]
    %v794 = vld [vmem:[#allocation8 + $0x1d0] sm:$0xff]
    %v795 = vld [vmem:[#allocation8 + $0x1d8] sm:$0xff]
    %v796 = vld [vmem:[#allocation8 + $0x1e0] sm:$0xff]
    %v797 = vld [vmem:[#allocation8 + $0x1e8] sm:$0xff]
    %v798 = vld [vmem:[#allocation8 + $0x1f0] sm:$0xff]
    %v799 = vld [vmem:[#allocation8 + $0x1f8] sm:$0xff]
    %v800 = vld [vmem:[%s6] sm:$0x1]
    %v802 = vlaneseq
    %v803 = vshrl.u32 %v802, 7
    %v804 = vsub.s32 0, %v803
    %v805 = vrot.slane %v800, %v804
    %807 = vmatprep.subr.mxu0 0.0
    %808 = vmatpush1.msra.mxu0 %v736
    %809 = vmatprep.subr.mxu0 0.0
    %810 = vmatpush1.msra.mxu0 %v737
    %811 = vmatprep.subr.mxu0 0.0
    %812 = vmatpush1.msra.mxu0 %v738
    %813 = vmatprep.subr.mxu0 0.0
    %814 = vmatpush1.msra.mxu0 %v739
    %815 = vmatprep.subr.mxu0 0.0
    %816 = vmatpush1.msra.mxu0 %v740
    %817 = vmatprep.subr.mxu0 0.0
    %818 = vmatpush1.msra.mxu0 %v741
    %819 = vmatprep.subr.mxu0 0.0
    %820 = vmatpush1.msra.mxu0 %v742
    %821 = vmatprep.subr.mxu0 0.0
    %822 = vmatpush1.msra.mxu0 %v743
    %823 = vmatprep.subr.mxu0 0.0
    %824 = vmatpush1.msra.mxu0 %v744
    %825 = vmatprep.subr.mxu0 0.0
    %826 = vmatpush1.msra.mxu0 %v745
    %827 = vmatprep.subr.mxu0 0.0
    %828 = vmatpush1.msra.mxu0 %v746
    %829 = vmatprep.subr.mxu0 0.0
    %830 = vmatpush1.msra.mxu0 %v747
    %831 = vmatprep.subr.mxu0 0.0
    %832 = vmatpush1.msra.mxu0 %v748
    %833 = vmatprep.subr.mxu0 0.0
    %834 = vmatpush1.msra.mxu0 %v749
    %835 = vmatprep.subr.mxu0 0.0
    %836 = vmatpush1.msra.mxu0 %v750
    %837 = vmatprep.subr.mxu0 0.0
    %838 = vmatpush1.msra.mxu0 %v751
    %839 = vmatprep.subr.mxu0 0.0
    %840 = vmatpush1.msra.mxu0 %v752
    %841 = vmatprep.subr.mxu0 0.0
    %842 = vmatpush1.msra.mxu0 %v753
    %843 = vmatprep.subr.mxu0 0.0
    %844 = vmatpush1.msra.mxu0 %v754
    %845 = vmatprep.subr.mxu0 0.0
    %846 = vmatpush1.msra.mxu0 %v755
    %847 = vmatprep.subr.mxu0 0.0
    %848 = vmatpush1.msra.mxu0 %v756
    %849 = vmatprep.subr.mxu0 0.0
    %850 = vmatpush1.msra.mxu0 %v757
    %851 = vmatprep.subr.mxu0 0.0
    %852 = vmatpush1.msra.mxu0 %v758
    %853 = vmatprep.subr.mxu0 0.0
    %854 = vmatpush1.msra.mxu0 %v759
    %855 = vmatprep.subr.mxu0 0.0
    %856 = vmatpush1.msra.mxu0 %v760
    %857 = vmatprep.subr.mxu0 0.0
    %858 = vmatpush1.msra.mxu0 %v761
    %859 = vmatprep.subr.mxu0 0.0
    %860 = vmatpush1.msra.mxu0 %v762
    %861 = vmatprep.subr.mxu0 0.0
    %862 = vmatpush1.msra.mxu0 %v763
    %863 = vmatprep.subr.mxu0 0.0
    %864 = vmatpush1.msra.mxu0 %v764
    %865 = vmatprep.subr.mxu0 0.0
    %866 = vmatpush1.msra.mxu0 %v765
    %867 = vmatprep.subr.mxu0 0.0
    %868 = vmatpush1.msra.mxu0 %v766
    %869 = vmatprep.subr.mxu0 0.0
    %870 = vmatpush1.msra.mxu0 %v767
    %871 = vmatprep.mubr.f32.mxu0 %v733
    %872 = vmatmul.mubr.f32.gmra.mrb[0].mxu0 %v732
    %v873 = vpop.f32.mrb[0].mxu0
    %v874 = vadd.f32 %v805, %v873
    %v875 = vpop.f32.mrb[0].mxu0
    %876 = vdwg.mxu0
    %877 = vmatprep.subr.mxu0 0.0
    %878 = vmatpush1.msra.mxu0 %v768
    %879 = vmatprep.subr.mxu0 0.0
    %880 = vmatpush1.msra.mxu0 %v769
    %881 = vmatprep.subr.mxu0 0.0
    %882 = vmatpush1.msra.mxu0 %v770
    %883 = vmatprep.subr.mxu0 0.0
    %884 = vmatpush1.msra.mxu0 %v771
    %885 = vmatprep.subr.mxu0 0.0
    %886 = vmatpush1.msra.mxu0 %v772
    %887 = vmatprep.subr.mxu0 0.0
    %888 = vmatpush1.msra.mxu0 %v773
    %889 = vmatprep.subr.mxu0 0.0
    %890 = vmatpush1.msra.mxu0 %v774
    %891 = vmatprep.subr.mxu0 0.0
    %892 = vmatpush1.msra.mxu0 %v775
    %893 = vmatprep.subr.mxu0 0.0
    %894 = vmatpush1.msra.mxu0 %v776
    %895 = vmatprep.subr.mxu0 0.0
    %896 = vmatpush1.msra.mxu0 %v777
    %897 = vmatprep.subr.mxu0 0.0
    %898 = vmatpush1.msra.mxu0 %v778
    %899 = vmatprep.subr.mxu0 0.0
    %900 = vmatpush1.msra.mxu0 %v779
    %901 = vmatprep.subr.mxu0 0.0
    %902 = vmatpush1.msra.mxu0 %v780
    %903 = vmatprep.subr.mxu0 0.0
    %904 = vmatpush1.msra.mxu0 %v781
    %905 = vmatprep.subr.mxu0 0.0
    %906 = vmatpush1.msra.mxu0 %v782
    %907 = vmatprep.subr.mxu0 0.0
    %908 = vmatpush1.msra.mxu0 %v783
    %909 = vmatprep.subr.mxu0 0.0
    %910 = vmatpush1.msra.mxu0 %v784
    %911 = vmatprep.subr.mxu0 0.0
    %912 = vmatpush1.msra.mxu0 %v785
    %913 = vmatprep.subr.mxu0 0.0
    %914 = vmatpush1.msra.mxu0 %v786
    %915 = vmatprep.subr.mxu0 0.0
    %916 = vmatpush1.msra.mxu0 %v787
    %917 = vmatprep.subr.mxu0 0.0
    %918 = vmatpush1.msra.mxu0 %v788
    %919 = vmatprep.subr.mxu0 0.0
    %920 = vmatpush1.msra.mxu0 %v789
    %921 = vmatprep.subr.mxu0 0.0
    %922 = vmatpush1.msra.mxu0 %v790
    %923 = vmatprep.subr.mxu0 0.0
    %924 = vmatpush1.msra.mxu0 %v791
    %925 = vmatprep.subr.mxu0 0.0
    %926 = vmatpush1.msra.mxu0 %v792
    %927 = vmatprep.subr.mxu0 0.0
    %928 = vmatpush1.msra.mxu0 %v793
    %929 = vmatprep.subr.mxu0 0.0
    %930 = vmatpush1.msra.mxu0 %v794
    %931 = vmatprep.subr.mxu0 0.0
    %932 = vmatpush1.msra.mxu0 %v795
    %933 = vmatprep.subr.mxu0 0.0
    %934 = vmatpush1.msra.mxu0 %v796
    %935 = vmatprep.subr.mxu0 0.0
    %936 = vmatpush1.msra.mxu0 %v797
    %937 = vmatprep.subr.mxu0 0.0
    %938 = vmatpush1.msra.mxu0 %v798
    %939 = vmatprep.subr.mxu0 0.0
    %940 = vmatpush1.msra.mxu0 %v799
    %941 = vmatprep.mubr.f32.mxu0 %v735
    %942 = vmatmul.mubr.f32.gmra.mrb[0].mxu0 %v734
    %v943 = vpop.f32.mrb[0].mxu0
    %v944 = vadd.f32 %v874, %v943
    %v945 = vpop.f32.mrb[0].mxu0
    %946 = vdwg.mxu0
    %947 = vst [vmem:[#allocation10] sm:$0xff] %v944
    // Predicated region
    $region46: #{tpu_custom_call.1} parent=1 // pred_check
      _
    $region47: #{tpu_custom_call.1} parent=1 // pred_check_branch
      %949 = sbr.rel (0) target = $region49
    $region48: #{tpu_custom_call.1} parent=1 // pred_region
      %s951 = ssub.s32 128, 128
      %952 = vsyncadd [#allocation4], %s951
      %s954 = sshll.u32 [#allocation10], 4
      %s955 = int_to_ptr.vmem [resolvable:$true] %s954
      %957 = dma.vmem_to_hbm [thread:$0]  %s955, 128, %s7, [#allocation4]
    $region49: #{tpu_custom_call.1} parent=1 // pred_fallthru
      _
    // Predicated region
    $region50: #{tpu_custom_call.1} parent=1 // pred_check
      _
    $region51: #{tpu_custom_call.1} parent=1 // pred_check_branch
      %959 = sbr.rel (0) target = $region53
    $region52: #{tpu_custom_call.1} parent=1 // pred_region
      %960 = dma.done [#allocation4], 128
    $region53: #{tpu_custom_call.1} parent=1 // pred_fallthru
      _
    %961 = vsyncpa [#allocation3], 1
    %962 = vsyncpa [#allocation6], 1
    %963 = vsyncpa [#allocation9], 1
    %964 = vsyncpa [#allocation4], 1

</llo_original>
